<compile_context>
chip_gen: v6e
topology: v6e:2x2x1
jax: 0.10.0
libtpu: 0.0.40
codegen_flags: <defaults>
</compile_context>

<pallas_src>
import jax
import jax.numpy as jnp
from jax.experimental import pallas as pl
from jax.experimental.pallas import tpu as pltpu


def _copy_kernel(x_ref, o_ref):
    # Pure element-wise pass-through on the current VMEM tile.
    o_ref[...] = x_ref[...]


_LANES = 128
_COLS = 8 * _LANES                     # 1024-wide lane-dense last dim -> unmasked vst
_TARGET_BLOCK_BYTES = 4 * 1024 * 1024  # ~4 MiB blocks amortize per-grid-step overhead
_VMEM_LIMIT_BYTES = 32 * 1024 * 1024   # 2x(in+out) double buffers of a 4 MiB block + headroom
                                       # (safe on v7x's 64 MiB physical; > v5e's 16 MiB default)


def _sublane_multiple(itemsize: int) -> int:
    # Sub-32-bit dtypes pack along sublanes: keep block rows a multiple of the
    # packing granularity so the copy stays pure DMA/vld/vst.
    return {4: 8, 2: 16, 1: 32}.get(itemsize, 8)


@jax.jit
def _pallas_identity(x: jax.Array) -> jax.Array:
    """Identity pass-through of `x` via a tiled, pipelined Pallas copy kernel."""
    orig_shape, orig_dtype = x.shape, x.dtype
    total = x.size
    if total == 0:
        return x

    itemsize = jnp.dtype(orig_dtype).itemsize
    sub_g = _sublane_multiple(itemsize)

    cols = _COLS
    rows = -(-total // cols)  # ceil

    # Block rows: aim for ~_TARGET_BLOCK_BYTES per block, rounded to the
    # sublane packing granularity.
    target_rows = max(sub_g, ((_TARGET_BLOCK_BYTES // (cols * itemsize)) // sub_g) * sub_g)
    if rows <= target_rows:
        tile_rows = rows                              # full extent -> always legal
    else:
        tile_rows = target_rows
        rows = -(-rows // tile_rows) * tile_rows      # pad rows to a multiple of the tile

    padded = rows * cols
    flat = x.reshape(-1)
    if padded != total:
        flat = jnp.pad(flat, (0, padded - total))
    x2 = flat.reshape(rows, cols)

    grid = (rows // tile_rows,)

    out2 = pl.pallas_call(
        _copy_kernel,
        out_shape=jax.ShapeDtypeStruct((rows, cols), orig_dtype),
        grid_spec=pltpu.PrefetchScalarGridSpec(
            num_scalar_prefetch=0,
            grid=grid,
            in_specs=[pl.BlockSpec((tile_rows, cols), lambda i: (i, 0))],
            out_specs=pl.BlockSpec((tile_rows, cols), lambda i: (i, 0)),
        ),
        compiler_params=pltpu.CompilerParams(
            dimension_semantics=("parallel",),
            vmem_limit_bytes=_VMEM_LIMIT_BYTES,
        ),
        # Let XLA reuse the input buffer for the output (pure copy, same shape/dtype).
        input_output_aliases={0: 0},
        # Advisory: zero flops, pure HBM read + write.
        cost_estimate=pl.CostEstimate(
            flops=0, transcendentals=0, bytes_accessed=2 * padded * itemsize
        ),
    )(x2)

    out = out2.reshape(-1)
    if padded != total:
        out = out[:total]
    return out.reshape(orig_shape)


def sequential_encoder(x: jax.Array, encoders=()) -> jax.Array:
    """Pallas port of SequentialEncoder.forward: applies `encoders` in order.

    With no sub-encoders (nn.Sequential() of zero modules) the forward is the
    identity; it is executed through the Pallas pass-through kernel above.
    NOTE: inside a larger jit graph the cheapest identity is simply `return x`;
    the kernel path is kept so the pass-through is demonstrably run on-chip.
    """
    if encoders:
        for enc in encoders:
            x = enc(x)
        return x
    return _pallas_identity(x)


if __name__ == "__main__":
    key = jax.random.PRNGKey(0)

    # Image-like NCHW input, as the encoder would typically receive.
    x = jax.random.normal(key, (2, 4, 16, 16), dtype=jnp.float32)
    y = jax.block_until_ready(sequential_encoder(x))
    assert y.shape == x.shape, (y.shape, x.shape)
    assert y.dtype == x.dtype, (y.dtype, x.dtype)
    assert bool(jnp.all(y == x)), "identity kernel output mismatch (f32)"

    # Non-128-divisible, sub-32-bit input exercises the padding path.
    x2 = jax.random.normal(jax.random.PRNGKey(1), (3, 5, 7), dtype=jnp.bfloat16)
    y2 = jax.block_until_ready(sequential_encoder(x2))
    assert y2.shape == x2.shape, (y2.shape, x2.shape)
    assert y2.dtype == x2.dtype, (y2.dtype, x2.dtype)
    assert bool(jnp.all(y2 == x2)), "identity kernel output mismatch (bf16/padded)"

    print("KERNEL_OK")
</pallas_src>

<mosaic_0001>
module attributes {stable_mosaic.version = 11 : i64} {
  func.func @_copy_kernel(%arg0: i32, %arg1: memref<2x1024xf32, #tpu.memory_space<vmem>>, %arg2: memref<2x1024xf32, #tpu.memory_space<vmem>>) attributes {dimension_semantics = [#tpu.dimension_semantics<parallel>], iteration_bounds = array<i64: 1>, scalar_prefetch = 0 : i64, scratch_operands = 0 : i64, tpu.core_type = #tpu.core_type<tc>, window_params = [{transform_indices = @transform_0, window_bounds = array<i64: 2, 1024>}, {transform_indices = @transform_1, window_bounds = array<i64: 2, 1024>}]} {
    %c0 = arith.constant 0 : index
    %c0_0 = arith.constant 0 : index
    %0 = vector.load %arg1[%c0, %c0_0] : memref<2x1024xf32, #tpu.memory_space<vmem>>, vector<2x1024xf32>
    %c0_1 = arith.constant 0 : index
    %c0_2 = arith.constant 0 : index
    %1 = vector.load %arg2[%c0_1, %c0_2] : memref<2x1024xf32, #tpu.memory_space<vmem>>, vector<2x1024xf32>
    tpu.vector_store %arg2[%c0_1, %c0_2], %0 {strides = array<i32>} : memref<2x1024xf32, #tpu.memory_space<vmem>>, vector<2x1024xf32>,
    return
  }
  func.func @transform_0(%arg0: i32) -> (i32, i32) {
    %c0_i32 = arith.constant 0 : i32
    %c0_i32_0 = arith.constant 0 : i32
    return %arg0, %c0_i32 : i32, i32
  }
  func.func @transform_1(%arg0: i32) -> (i32, i32) {
    %c0_i32 = arith.constant 0 : i32
    %c0_i32_0 = arith.constant 0 : i32
    return %arg0, %c0_i32 : i32, i32
  }
}

</mosaic_0001>

<llo_original>
// kernel: _pallas_identity.1
$region0: #{_pallas_identity.1}
  #allocation0 [shape = 'u32[]', space=smem, size = 0x4, offset = 0x4, fixed_abs, tag = 'smem constant byte address 0x4 - core index']
  #allocation1 [shape = 'u32[144,128]{1,0:T(1,128)}', space=vmem, size = 0x12000, scoped, tag = 'internal scratch']
  %s0 = inlined_call_operand.vmem [shape: f32[2,1024], index: 0, kind: input, shape index: {}, may-alias: {0,1}]
  %s1 = inlined_call_operand.vmem [shape: f32[2,1024], index: 1, kind: output, shape index: {}, may-alias: {0,1}]
  %s2 = sld [smem:[#allocation0]]
  $region14: #{_pallas_identity.1} parent=0
    _
  %s4 = ssub.s32 1, %s2
  %s5 = scalar_select 0, %s4, %s2
  // Predicated region
  $region2: #{_pallas_identity.1} parent=0 // pred_check
    _
  $region3: #{_pallas_identity.1} parent=0 // pred_check_branch
    %7 = sbr.rel (0) target = $region5
  $region4: #{_pallas_identity.1} parent=0 // pred_region
    _
  $region5: #{_pallas_identity.1} parent=0 // pred_fallthru
    _
  %v8 = vld [vmem:[%s0] sm:$0xff]
  %v9 = vld [vmem:[%s0 + $0x8] sm:$0xff]
  %10 = vst [vmem:[%s1] sm:$0xff] %v8
  %11 = vst [vmem:[%s1 + $0x8] sm:$0xff] %v9
  // Predicated region
  $region6: #{_pallas_identity.1} parent=0 // pred_check
    _
  $region7: #{_pallas_identity.1} parent=0 // pred_check_branch
    %13 = sbr.rel (0) target = $region9
  $region8: #{_pallas_identity.1} parent=0 // pred_region
    _
  $region9: #{_pallas_identity.1} parent=0 // pred_fallthru
    _
  // Predicated region
  $region10: #{_pallas_identity.1} parent=0 // pred_check
    _
  $region11: #{_pallas_identity.1} parent=0 // pred_check_branch
    %15 = sbr.rel (0) target = $region13
  $region12: #{_pallas_identity.1} parent=0 // pred_region
    _
  $region13: #{_pallas_identity.1} parent=0 // pred_fallthru
    _

</llo_original>
